<compile_context>
chip_gen: v5e
topology: v5e:2x2
jax: 0.10.0
libtpu: 0.0.40
codegen_flags: <defaults>
</compile_context>

<pallas_src>
import functools
import math

import jax
import jax.numpy as jnp
from jax.experimental import pallas as pl
from jax.experimental.pallas import tpu as pltpu

EPS = 1e-5
NEG = -1e9


# ------------------------------ small helpers --------------------------------

def _round_up(x, m):
    return ((x + m - 1) // m) * m


def _pick_vmem_limit():
    # 96 MiB on v5e/v6e (128 MiB physical), ~48 MiB on v7x (64 MiB physical);
    # conservative 32 MiB if the chip cannot be queried (e.g. interpret mode).
    try:
        cap = int(pltpu.get_tpu_info().vmem_capacity_bytes)
        return int(min(96 * 1024 * 1024, cap * 3 // 4))
    except Exception:
        return 32 * 1024 * 1024


VMEM_LIMIT = _pick_vmem_limit()


def _pad_last(x, n):
    pad = n - x.shape[-1]
    if pad == 0:
        return x
    cfg = [(0, 0)] * (x.ndim - 1) + [(0, pad)]
    return jnp.pad(x, cfg)


# ----------------------------- layernorm kernel ------------------------------
# Feature axis is pre-padded to Hp; statistics use the real width h_real and
# rely on padded columns being zero (guaranteed by zero-padded inputs, weights
# and LN gamma/beta).

def _ln_kernel(x_ref, w_ref, b_ref, o_ref, *, h_real, eps):
    x = x_ref[0].astype(jnp.float32)                       # [T, Hp]
    mean = jnp.sum(x, axis=-1, keepdims=True) * (1.0 / h_real)
    var = jnp.sum(x * x, axis=-1, keepdims=True) * (1.0 / h_real) - mean * mean
    xn = (x - mean) * jax.lax.rsqrt(var + eps)
    o_ref[0] = (xn * w_ref[...] + b_ref[...]).astype(o_ref.dtype)


def layernorm(x, w, b, h_real, out_dtype=jnp.bfloat16):
    B, T, Hp = x.shape
    return pl.pallas_call(
        functools.partial(_ln_kernel, h_real=h_real, eps=EPS),
        grid=(B,),
        out_shape=jax.ShapeDtypeStruct((B, T, Hp), out_dtype),
        in_specs=[pl.BlockSpec((1, T, Hp), lambda i: (i, 0, 0)),
                  pl.BlockSpec((1, Hp), lambda i: (0, 0)),
                  pl.BlockSpec((1, Hp), lambda i: (0, 0))],
        out_specs=pl.BlockSpec((1, T, Hp), lambda i: (i, 0, 0)),
        compiler_params=pltpu.CompilerParams(
            dimension_semantics=("parallel",),
            vmem_limit_bytes=VMEM_LIMIT),
    )(x, w, b)


# ------------- fused self-attention block (QKV + attn + Wo + LN) -------------

def _self_attn_layer_kernel(x_ref, wqkv_ref, bqkv_ref, wo_ref, bo_ref,
                            lnw_ref, lnb_ref, bias_ref, kpad_ref,
                            y_ref, attn_ref, *, n_heads, dh, dh_p, h_real, eps):
    x = x_ref[0]                                           # [T, Hp] bf16
    T, Hp = x.shape
    Hh = n_heads * dh_p
    scale = 1.0 / math.sqrt(dh)

    # Fused QKV projection (single MXU matmul), f32 accumulation.
    qkv = jnp.dot(x, wqkv_ref[...], preferred_element_type=jnp.float32)
    qkv = (qkv + bqkv_ref[...]).astype(jnp.bfloat16)       # [T, 3*Hh]

    wo = wo_ref[...]                                       # [Hh, Hp] bf16
    kp = kpad_ref[0]                                       # [1, T] f32 pad bias
    acc = jnp.zeros((T, Hp), jnp.float32)
    attn_sum = jnp.zeros((T, T), jnp.float32)

    for h in range(n_heads):                               # unrolled, lane-aligned slices
        q_h = qkv[:, h * dh_p:(h + 1) * dh_p]
        k_h = qkv[:, Hh + h * dh_p:Hh + (h + 1) * dh_p]
        v_h = qkv[:, 2 * Hh + h * dh_p:2 * Hh + (h + 1) * dh_p]
        s = jax.lax.dot_general(q_h, k_h, (((1,), (1,)), ((), ())),
                                preferred_element_type=jnp.float32)
        s = s * scale + bias_ref[h] + kp                   # ALiBi + causal + key-pad
        m = jnp.max(s, axis=-1, keepdims=True)
        p = jnp.exp(s - m)
        attn_h = p * pl.reciprocal(jnp.sum(p, axis=-1, keepdims=True), approx=True)
        attn_sum = attn_sum + attn_h
        o_h = jnp.dot(attn_h.astype(jnp.bfloat16), v_h,
                      preferred_element_type=jnp.float32)  # [T, dh_p]
        acc = acc + jnp.dot(o_h.astype(jnp.bfloat16), wo[h * dh_p:(h + 1) * dh_p, :],
                            preferred_element_type=jnp.float32)

    # out-proj bias, residual, post-LN (stats over the real width only).
    pre = x.astype(jnp.float32) + acc + bo_ref[...]
    mean = jnp.sum(pre, axis=-1, keepdims=True) * (1.0 / h_real)
    var = jnp.sum(pre * pre, axis=-1, keepdims=True) * (1.0 / h_real) - mean * mean
    xn = (pre - mean) * jax.lax.rsqrt(var + eps)
    y_ref[0] = (xn * lnw_ref[...] + lnb_ref[...]).astype(y_ref.dtype)
    attn_ref[0] = attn_sum * (1.0 / n_heads)               # head-mean attention weights


def self_attn_layer(x, p, bias, kpad, *, n_heads, dh, dh_p, h_real):
    B, T, Hp = x.shape
    Hh = n_heads * dh_p
    cost = pl.CostEstimate(
        flops=int(2 * B * T * Hp * 3 * Hh + 4 * B * n_heads * T * T * dh_p
                  + 2 * B * T * Hh * Hp),
        transcendentals=int(B * n_heads * T * T),
        bytes_accessed=int(4 * B * T * Hp + 2 * (Hp * 3 * Hh + Hh * Hp)
                           + 4 * (n_heads + B) * T * T))
    y, attn = pl.pallas_call(
        functools.partial(_self_attn_layer_kernel, n_heads=n_heads, dh=dh,
                          dh_p=dh_p, h_real=h_real, eps=EPS),
        grid=(B,),
        out_shape=(jax.ShapeDtypeStruct((B, T, Hp), jnp.bfloat16),
                   jax.ShapeDtypeStruct((B, T, T), jnp.float32)),
        in_specs=[pl.BlockSpec((1, T, Hp), lambda b: (b, 0, 0)),
                  pl.BlockSpec((Hp, 3 * Hh), lambda b: (0, 0)),
                  pl.BlockSpec((1, 3 * Hh), lambda b: (0, 0)),
                  pl.BlockSpec((Hh, Hp), lambda b: (0, 0)),
                  pl.BlockSpec((1, Hp), lambda b: (0, 0)),
                  pl.BlockSpec((1, Hp), lambda b: (0, 0)),
                  pl.BlockSpec((1, Hp), lambda b: (0, 0)),
                  pl.BlockSpec((n_heads, T, T), lambda b: (0, 0, 0)),
                  pl.BlockSpec((1, 1, T), lambda b: (b, 0, 0))],
        out_specs=(pl.BlockSpec((1, T, Hp), lambda b: (b, 0, 0)),
                   pl.BlockSpec((1, T, T), lambda b: (b, 0, 0))),
        compiler_params=pltpu.CompilerParams(
            dimension_semantics=("parallel",),
            vmem_limit_bytes=VMEM_LIMIT),
        cost_estimate=cost,
    )(x, p['wqkv'], p['bqkv'], p['wo'], p['bo'], p['ln1_w'], p['ln1_b'], bias, kpad)
    return y, attn


# ------------------ fused FFN block (W1+ReLU+W2 + residual + LN) -------------

def _ffn_layer_kernel(x_ref, w1_ref, b1_ref, w2_ref, b2_ref, lnw_ref, lnb_ref,
                      y_ref, *, h_real, eps):
    x = x_ref[0]                                           # [T, Hp] bf16
    h = jnp.dot(x, w1_ref[...], preferred_element_type=jnp.float32) + b1_ref[...]
    h = jnp.maximum(h, 0.0).astype(jnp.bfloat16)           # fused bias + ReLU
    z = jnp.dot(h, w2_ref[...], preferred_element_type=jnp.float32) + b2_ref[...]
    pre = x.astype(jnp.float32) + z
    mean = jnp.sum(pre, axis=-1, keepdims=True) * (1.0 / h_real)
    var = jnp.sum(pre * pre, axis=-1, keepdims=True) * (1.0 / h_real) - mean * mean
    xn = (pre - mean) * jax.lax.rsqrt(var + eps)
    y_ref[0] = (xn * lnw_ref[...] + lnb_ref[...]).astype(y_ref.dtype)


def ffn_layer(x, p, *, h_real):
    B, T, Hp = x.shape
    Fp = p['ff_w1'].shape[1]
    cost = pl.CostEstimate(flops=int(4 * B * T * Hp * Fp), transcendentals=0,
                           bytes_accessed=int(4 * B * T * Hp + 4 * Hp * Fp))
    return pl.pallas_call(
        functools.partial(_ffn_layer_kernel, h_real=h_real, eps=EPS),
        grid=(B,),
        out_shape=jax.ShapeDtypeStruct((B, T, Hp), jnp.bfloat16),
        in_specs=[pl.BlockSpec((1, T, Hp), lambda b: (b, 0, 0)),
                  pl.BlockSpec((Hp, Fp), lambda b: (0, 0)),
                  pl.BlockSpec((1, Fp), lambda b: (0, 0)),
                  pl.BlockSpec((Fp, Hp), lambda b: (0, 0)),
                  pl.BlockSpec((1, Hp), lambda b: (0, 0)),
                  pl.BlockSpec((1, Hp), lambda b: (0, 0)),
                  pl.BlockSpec((1, Hp), lambda b: (0, 0))],
        out_specs=pl.BlockSpec((1, T, Hp), lambda b: (b, 0, 0)),
        compiler_params=pltpu.CompilerParams(
            dimension_semantics=("parallel",),
            vmem_limit_bytes=VMEM_LIMIT),
        cost_estimate=cost,
    )(x, p['ff_w1'], p['ff_b1'], p['ff_w2'], p['ff_b2'], p['ln2_w'], p['ln2_b'])


# ------------ fused cross-attention (aligner) + Wo + residual + LN -----------

def _cross_attn_layer_kernel(xq_ref, xkv_ref, wq_ref, bq_ref, wkv_ref, bkv_ref,
                             wo_ref, bo_ref, lnw_ref, lnb_ref, kpad_ref,
                             y_ref, align_ref, *, n_heads, dh, dh_p, h_real, eps):
    xq = xq_ref[0]                                         # [Tq, Hp] bf16
    xm = xkv_ref[0]                                        # [Tk, Hp] bf16
    Tq, Hp = xq.shape
    Hh = n_heads * dh_p
    scale = 1.0 / math.sqrt(dh)

    q = (jnp.dot(xq, wq_ref[...], preferred_element_type=jnp.float32)
         + bq_ref[...]).astype(jnp.bfloat16)               # [Tq, Hh]
    kv = (jnp.dot(xm, wkv_ref[...], preferred_element_type=jnp.float32)
          + bkv_ref[...]).astype(jnp.bfloat16)             # [Tk, 2*Hh]

    wo = wo_ref[...]
    kp = kpad_ref[0]                                       # [1, Tk]
    acc = jnp.zeros((Tq, Hp), jnp.float32)
    for h in range(n_heads):
        q_h = q[:, h * dh_p:(h + 1) * dh_p]
        k_h = kv[:, h * dh_p:(h + 1) * dh_p]
        v_h = kv[:, Hh + h * dh_p:Hh + (h + 1) * dh_p]
        s = jax.lax.dot_general(q_h, k_h, (((1,), (1,)), ((), ())),
                                preferred_element_type=jnp.float32)
        s = s * scale + kp
        m = jnp.max(s, axis=-1, keepdims=True)
        p_ = jnp.exp(s - m)
        attn_h = p_ / jnp.sum(p_, axis=-1, keepdims=True)  # exact: feeds alignment
        align_ref[0, h] = attn_h
        o_h = jnp.dot(attn_h.astype(jnp.bfloat16), v_h,
                      preferred_element_type=jnp.float32)
        acc = acc + jnp.dot(o_h.astype(jnp.bfloat16), wo[h * dh_p:(h + 1) * dh_p, :],
                            preferred_element_type=jnp.float32)

    pre = xq.astype(jnp.float32) + acc + bo_ref[...]
    mean = jnp.sum(pre, axis=-1, keepdims=True) * (1.0 / h_real)
    var = jnp.sum(pre * pre, axis=-1, keepdims=True) * (1.0 / h_real) - mean * mean
    xn = (pre - mean) * jax.lax.rsqrt(var + eps)
    y_ref[0] = (xn * lnw_ref[...] + lnb_ref[...]).astype(y_ref.dtype)


def cross_attn_layer(xq, xkv, p, kpad, *, n_heads, dh, dh_p, h_real):
    B, Tq, Hp = xq.shape
    Tk = xkv.shape[1]
    Hh = n_heads * dh_p
    y, align = pl.pallas_call(
        functools.partial(_cross_attn_layer_kernel, n_heads=n_heads, dh=dh,
                          dh_p=dh_p, h_real=h_real, eps=EPS),
        grid=(B,),
        out_shape=(jax.ShapeDtypeStruct((B, Tq, Hp), jnp.bfloat16),
                   jax.ShapeDtypeStruct((B, n_heads, Tq, Tk), jnp.float32)),
        in_specs=[pl.BlockSpec((1, Tq, Hp), lambda b: (b, 0, 0)),
                  pl.BlockSpec((1, Tk, Hp), lambda b: (b, 0, 0)),
                  pl.BlockSpec((Hp, Hh), lambda b: (0, 0)),
                  pl.BlockSpec((1, Hh), lambda b: (0, 0)),
                  pl.BlockSpec((Hp, 2 * Hh), lambda b: (0, 0)),
                  pl.BlockSpec((1, 2 * Hh), lambda b: (0, 0)),
                  pl.BlockSpec((Hh, Hp), lambda b: (0, 0)),
                  pl.BlockSpec((1, Hp), lambda b: (0, 0)),
                  pl.BlockSpec((1, Hp), lambda b: (0, 0)),
                  pl.BlockSpec((1, Hp), lambda b: (0, 0)),
                  pl.BlockSpec((1, 1, Tk), lambda b: (b, 0, 0))],
        out_specs=(pl.BlockSpec((1, Tq, Hp), lambda b: (b, 0, 0)),
                   pl.BlockSpec((1, n_heads, Tq, Tk), lambda b: (b, 0, 0, 0))),
        compiler_params=pltpu.CompilerParams(
            dimension_semantics=("parallel",),
            vmem_limit_bytes=VMEM_LIMIT),
    )(xq, xkv, p['wq'], p['bq'], p['wkv'], p['bkv'], p['wo'], p['bo'],
      p['ln_w'], p['ln_b'], kpad)
    return y, align


# ------------------- transducer output heads (fused matmul) ------------------

def _head_kernel(x_ref, w_ref, b_ref, o_ref):
    o_ref[0] = (jnp.dot(x_ref[0], w_ref[...], preferred_element_type=jnp.float32)
                + b_ref[...]).astype(o_ref.dtype)


def transducer_decode(x, p, *, n_groups, vocab, vocab_p):
    # TODO(synk): Transducer.decode internals unknown; independent per-group
    # linear heads, fused into one lane-dense [Hp, G*Vp] matmul.
    B, T, Hp = x.shape
    No = n_groups * vocab_p
    logits = pl.pallas_call(
        _head_kernel,
        grid=(B,),
        out_shape=jax.ShapeDtypeStruct((B, T, No), jnp.float32),
        in_specs=[pl.BlockSpec((1, T, Hp), lambda b: (b, 0, 0)),
                  pl.BlockSpec((Hp, No), lambda b: (0, 0)),
                  pl.BlockSpec((1, No), lambda b: (0, 0))],
        out_specs=pl.BlockSpec((1, T, No), lambda b: (b, 0, 0)),
        compiler_params=pltpu.CompilerParams(
            dimension_semantics=("parallel",),
            vmem_limit_bytes=VMEM_LIMIT),
    )(x, p['out_w'], p['out_b'])
    logits = logits.reshape(B, T, n_groups, vocab_p)
    return logits[..., :vocab]                             # [B, T, G, V]


# ------------------------------ model pieces ---------------------------------

def get_slopes(n):
    def pow2(n):
        start = 2 ** (-2 ** -(math.log2(n) - 3))
        return [start * (start ** i) for i in range(n)]
    if math.log2(n).is_integer():
        return pow2(n)
    closest = 2 ** math.floor(math.log2(n))
    return pow2(closest) + get_slopes(2 * closest)[0::2][:n - closest]


def make_attn_bias(n_heads, T, causal):
    """Batch-invariant ALiBi (+causal) additive bias [nH, T, T] built OUTSIDE the
    kernel (fixes the captured-constant error; hoists O(T^2) VPU work)."""
    # TODO(synk): AlibiPostionEmbedding not shown; symmetric -|i-j|*slope assumed,
    # with row 0 / column 0 zeroed as in the reference forward().
    qi = jax.lax.broadcasted_iota(jnp.int32, (T, T), 0)
    ki = jax.lax.broadcasted_iota(jnp.int32, (T, T), 1)
    rel = -jnp.abs(qi - ki).astype(jnp.float32)
    rel = jnp.where(jnp.logical_or(qi == 0, ki == 0), 0.0, rel)
    slopes = jnp.asarray(get_slopes(n_heads), jnp.float32).reshape(n_heads, 1, 1)
    bias = slopes * rel[None]
    if causal:
        bias = bias + jnp.where(ki > qi, NEG, 0.0)[None]
    return bias


def pad_bias(mask):
    """bool [B,Tk] (True = pad) -> additive f32 [B,1,Tk]."""
    return jnp.where(mask, NEG, 0.0).astype(jnp.float32)[:, None, :]


def transducer_encode(codes, emb):
    # TODO(synk): Transducer.encode internals unknown; sum of per-group code
    # embeddings (tables stored pre-padded to Hp).  Gather stays in XLA.
    G = codes.shape[-1]
    out = emb[0][codes[..., 0]].astype(jnp.float32)
    for g in range(1, G):
        out = out + emb[g][codes[..., g]].astype(jnp.float32)
    return out


def tts_decoder_forward(params, q_codes, phone, spkr, q_mask, phone_mask, hp):
    H = hp['hidden_size']
    nH = hp['nheads']
    dh = H // nH
    Hp = _round_up(H, 128)
    dh_p = _round_up(dh, 128)
    G = hp['n_cluster_groups']
    V = hp['n_codes'] + 3
    Vp = _round_up(V, 128)
    B, Tp, _ = phone.shape
    Tq = q_codes.shape[1]
    kw = dict(n_heads=nH, dh=dh, dh_p=dh_p, h_real=H)

    # ---- phone / speaker branch ---------------------------------------------
    spkr_p = _pad_last(spkr[:, None, :], Hp)               # pad feature dim ONCE
    phone_p = _pad_last(phone, Hp)
    spkr_n = layernorm(spkr_p, params['ln_spkr_w'], params['ln_spkr_b'], H)
    phone_n = layernorm(phone_p, params['ln_phone_w'], params['ln_phone_b'], H)
    x = jnp.concatenate([spkr_n, phone_n], axis=1)         # [B, 1+Tp, Hp]

    ex_phone_mask = jnp.concatenate(
        [jnp.zeros((B, 1), dtype=bool), phone_mask], axis=1)
    enc_kpad = pad_bias(ex_phone_mask)
    enc_bias = make_attn_bias(nH, Tp + 1, causal=False)

    enc_attn = []
    for lp in params['enc_layers']:
        # TODO(synk): TransformerEncoderLayer internals not shown; standard
        # post-LN self-attention + ReLU FFN assumed.
        x, aw = self_attn_layer(x, lp, enc_bias, enc_kpad, **kw)
        x = ffn_layer(x, lp, h_real=H)
        enc_attn.append(aw)
    phone_enc = x[:, 1:]                                   # drop speaker token

    # ---- audio (codes) branch -----------------------------------------------
    ex_q_mask = jnp.concatenate([jnp.zeros((B, 1), dtype=bool), q_mask], axis=1)
    dec_kpad = pad_bias(ex_q_mask)
    dec_bias = make_attn_bias(nH, Tq + 1, causal=True)

    q_emb = transducer_encode(q_codes, params['enc_emb'])
    q_emb = layernorm(q_emb, params['ln_w'], params['ln_b'], H)
    y = jnp.concatenate([spkr_n, q_emb], axis=1)           # [B, 1+Tq, Hp]

    dec_attn = []
    for lp in params['dec_layers']:
        y, aw = self_attn_layer(y, lp, dec_bias, dec_kpad, **kw)
        y = ffn_layer(y, lp, h_real=H)
        dec_attn.append(aw)

    # ---- aligner: cross-attention-only layer --------------------------------
    align_kpad = pad_bias(phone_mask)
    y, alignment = cross_attn_layer(y, phone_enc, params['aligner'], align_kpad, **kw)

    # ---- transducer output heads --------------------------------------------
    audio_output = y[:, 1:]
    logits = transducer_decode(audio_output, params['transducer'],
                               n_groups=G, vocab=V, vocab_p=Vp)
    return {'logits': logits, 'alignment': alignment,
            'decoder_attention': dec_attn, 'encoder_attention': enc_attn}


# ---------------------------- parameter init ----------------------------------
# All weights are padded to lane-dense layouts ONCE here (per-head dims padded
# to dh_p=round_up(dh,128)), so the forward never pads/slices per call.

def init_params(key, hp):
    H = hp['hidden_size']
    F = hp['ffn_dim']
    nH = hp['nheads']
    dh = H // nH
    Hp = _round_up(H, 128)
    Fp = _round_up(F, 128)
    dh_p = _round_up(dh, 128)
    Hh = nH * dh_p
    G = hp['n_cluster_groups']
    V = hp['n_codes'] + 3
    Vp = _round_up(V, 128)
    keys = iter(jax.random.split(key, 1024))

    def dense(din, dout):
        return jax.random.normal(next(keys), (din, dout), jnp.float32) * 0.02

    def head_cols(w):        # [H, nH*dh] -> [Hp, nH*dh_p]
        w = w.reshape(H, nH, dh)
        w = jnp.pad(w, ((0, Hp - H), (0, 0), (0, dh_p - dh)))
        return w.reshape(Hp, Hh).astype(jnp.bfloat16)

    def head_rows(w):        # [nH*dh, H] -> [nH*dh_p, Hp]
        w = w.reshape(nH, dh, H)
        w = jnp.pad(w, ((0, 0), (0, dh_p - dh), (0, Hp - H)))
        return w.reshape(Hh, Hp).astype(jnp.bfloat16)

    def head_vec(b):         # [nH*dh] -> [1, nH*dh_p]
        b = b.reshape(nH, dh)
        b = jnp.pad(b, ((0, 0), (0, dh_p - dh)))
        return b.reshape(1, Hh).astype(jnp.float32)

    def pad_mat(w, rows, cols):
        return jnp.pad(w, ((0, rows - w.shape[0]),
                           (0, cols - w.shape[1]))).astype(jnp.bfloat16)

    def pad_vec(v, cols):
        return jnp.pad(v, (0, cols - v.shape[0])).reshape(1, cols).astype(jnp.float32)

    def layer():
        return {
            'wqkv': jnp.concatenate([head_cols(dense(H, H)) for _ in range(3)], axis=1),
            'bqkv': jnp.concatenate([head_vec(jnp.zeros((H,), jnp.float32))
                                     for _ in range(3)], axis=1),
            'wo': head_rows(dense(H, H)),
            'bo': pad_vec(jnp.zeros((H,), jnp.float32), Hp),
            'ln1_w': pad_vec(jnp.ones((H,), jnp.float32), Hp),
            'ln1_b': pad_vec(jnp.zeros((H,), jnp.float32), Hp),
            'ff_w1': pad_mat(dense(H, F), Hp, Fp),
            'ff_b1': pad_vec(jnp.zeros((F,), jnp.float32), Fp),
            'ff_w2': pad_mat(dense(F, H), Fp, Hp),
            'ff_b2': pad_vec(jnp.zeros((H,), jnp.float32), Hp),
            'ln2_w': pad_vec(jnp.ones((H,), jnp.float32), Hp),
            'ln2_b': pad_vec(jnp.zeros((H,), jnp.float32), Hp),
        }

    def aligner():
        return {
            'wq': head_cols(dense(H, H)),
            'bq': head_vec(jnp.zeros((H,), jnp.float32)),
            'wkv': jnp.concatenate([head_cols(dense(H, H)) for _ in range(2)], axis=1),
            'bkv': jnp.concatenate([head_vec(jnp.zeros((H,), jnp.float32))
                                    for _ in range(2)], axis=1),
            'wo': head_rows(dense(H, H)),
            'bo': pad_vec(jnp.zeros((H,), jnp.float32), Hp),
            'ln_w': pad_vec(jnp.ones((H,), jnp.float32), Hp),
            'ln_b': pad_vec(jnp.zeros((H,), jnp.float32), Hp),
        }

    enc_emb = jax.random.normal(next(keys), (G, V, H), jnp.float32) * 0.02
    enc_emb = jnp.pad(enc_emb, ((0, 0), (0, 0), (0, Hp - H))).astype(jnp.bfloat16)

    out_w = jnp.stack([dense(H, V) for _ in range(G)], axis=0)      # [G, H, V]
    out_w = jnp.pad(out_w, ((0, 0), (0, Hp - H), (0, Vp - V)))
    out_w = out_w.transpose(1, 0, 2).reshape(Hp, G * Vp).astype(jnp.bfloat16)
    out_b = jnp.zeros((1, G * Vp), jnp.float32)

    return {
        'enc_layers': [layer() for _ in range(hp['enc_nlayers'])],
        'dec_layers': [layer() for _ in range(hp['dec_nlayers'])],
        'aligner': aligner(),
        'ln_phone_w': pad_vec(jnp.ones((H,), jnp.float32), Hp),
        'ln_phone_b': pad_vec(jnp.zeros((H,), jnp.float32), Hp),
        'ln_spkr_w': pad_vec(jnp.ones((H,), jnp.float32), Hp),
        'ln_spkr_b': pad_vec(jnp.zeros((H,), jnp.float32), Hp),
        'ln_w': pad_vec(jnp.ones((H,), jnp.float32), Hp),
        'ln_b': pad_vec(jnp.zeros((H,), jnp.float32), Hp),
        'enc_emb': enc_emb,
        'transducer': {'out_w': out_w, 'out_b': out_b},
    }


# ---------------------------------- main ---------------------------------------

if __name__ == "__main__":
    hp = dict(hidden_size=32, nheads=4, enc_nlayers=2, dec_nlayers=2,
              ffn_dim=64, n_cluster_groups=2, n_codes=10, layer_norm_eps=EPS)
    B, Tp, Tq = 2, 8, 6

    key = jax.random.PRNGKey(0)
    kparam, kq, kph, ksp = jax.random.split(key, 4)
    params = init_params(kparam, hp)

    q_codes = jax.random.randint(kq, (B, Tq, hp['n_cluster_groups']), 0, hp['n_codes'])
    phone = jax.random.normal(kph, (B, Tp, hp['hidden_size']), jnp.float32)
    spkr = jax.random.normal(ksp, (B, hp['hidden_size']), jnp.float32)
    q_mask = jnp.zeros((B, Tq), dtype=bool).at[1, Tq - 2:].set(True)       # True = pad
    phone_mask = jnp.zeros((B, Tp), dtype=bool).at[1, Tp - 3:].set(True)   # True = pad

    out = tts_decoder_forward(params, q_codes, phone, spkr, q_mask, phone_mask, hp)
    out = jax.tree_util.tree_map(jax.block_until_ready, out)

    assert out['logits'].shape == (B, Tq, hp['n_cluster_groups'], hp['n_codes'] + 3)
    assert out['alignment'].shape == (B, hp['nheads'], Tq + 1, Tp)
    assert not bool(jnp.any(jnp.isnan(out['logits'])))
    assert not bool(jnp.any(jnp.isnan(out['alignment'])))
    print("KERNEL_OK")
</pallas_src>

<mosaic_0001>
module attributes {stable_mosaic.version = 11 : i64} {
  func.func @_ln_kernel(%arg0: i32, %arg1: memref<1x1x128xf32, #tpu.memory_space<vmem>>, %arg2: memref<1x128xf32, #tpu.memory_space<vmem>>, %arg3: memref<1x128xf32, #tpu.memory_space<vmem>>, %arg4: memref<1x1x128xbf16, #tpu.memory_space<vmem>>) attributes {dimension_semantics = [#tpu.dimension_semantics<parallel>], iteration_bounds = array<i64: 2>, scalar_prefetch = 0 : i64, scratch_operands = 0 : i64, tpu.core_type = #tpu.core_type<tc>, window_params = [{transform_indices = @transform_0, window_bounds = array<i64: 1, 1, 128>}, {pipeline_mode = #tpu.pipeline_mode<synchronous>, transform_indices = @transform_1, window_bounds = array<i64: 1, 128>}, {pipeline_mode = #tpu.pipeline_mode<synchronous>, transform_indices = @transform_2, window_bounds = array<i64: 1, 128>}, {transform_indices = @transform_3, window_bounds = array<i64: 1, 1, 128>}]} {
    %c0 = arith.constant 0 : index
    %c0_0 = arith.constant 0 : index
    %c0_1 = arith.constant 0 : index
    %0 = vector.load %arg1[%c0, %c0_0, %c0_1] : memref<1x1x128xf32, #tpu.memory_space<vmem>>, vector<1x1x128xf32>
    %1 = vector.shape_cast %0 : vector<1x1x128xf32> to vector<1x128xf32>
    %cst = arith.constant dense<0.000000e+00> : vector<1xf32>
    %2 = vector.multi_reduction <add>, %1, %cst [1] : vector<1x128xf32> to vector<1xf32>
    %3 = vector.shape_cast %2 : vector<1xf32> to vector<1x1xf32>
    %cst_2 = arith.constant 3.125000e-02 : f32
    %4 = vector.broadcast %cst_2 : f32 to vector<1x1xf32>
    %5 = arith.mulf %3, %4 : vector<1x1xf32>
    %6 = arith.mulf %1, %1 : vector<1x128xf32>
    %cst_3 = arith.constant dense<0.000000e+00> : vector<1xf32>
    %7 = vector.multi_reduction <add>, %6, %cst_3 [1] : vector<1x128xf32> to vector<1xf32>
    %8 = vector.shape_cast %7 : vector<1xf32> to vector<1x1xf32>
    %cst_4 = arith.constant 3.125000e-02 : f32
    %9 = vector.broadcast %cst_4 : f32 to vector<1x1xf32>
    %10 = arith.mulf %8, %9 : vector<1x1xf32>
    %11 = arith.mulf %5, %5 : vector<1x1xf32>
    %12 = arith.subf %10, %11 : vector<1x1xf32>
    %13 = vector.broadcast %5 : vector<1x1xf32> to vector<1x128xf32>
    %14 = arith.subf %1, %13 : vector<1x128xf32>
    %cst_5 = arith.constant 9.99999974E-6 : f32
    %15 = vector.broadcast %cst_5 : f32 to vector<1x1xf32>
    %16 = arith.addf %12, %15 : vector<1x1xf32>
    %17 = math.rsqrt %16 : vector<1x1xf32>
    %18 = vector.broadcast %17 : vector<1x1xf32> to vector<1x128xf32>
    %19 = arith.mulf %14, %18 : vector<1x128xf32>
    %c0_6 = arith.constant 0 : index
    %c0_7 = arith.constant 0 : index
    %20 = vector.load %arg2[%c0_6, %c0_7] : memref<1x128xf32, #tpu.memory_space<vmem>>, vector<1x128xf32>
    %21 = arith.mulf %19, %20 : vector<1x128xf32>
    %c0_8 = arith.constant 0 : index
    %c0_9 = arith.constant 0 : index
    %22 = vector.load %arg3[%c0_8, %c0_9] : memref<1x128xf32, #tpu.memory_space<vmem>>, vector<1x128xf32>
    %23 = arith.addf %21, %22 : vector<1x128xf32>
    %24 = arith.truncf %23 : vector<1x128xf32> to vector<1x128xbf16>
    %c0_10 = arith.constant 0 : index
    %c0_11 = arith.constant 0 : index
    %c0_12 = arith.constant 0 : index
    %25 = vector.load %arg4[%c0_10, %c0_11, %c0_12] : memref<1x1x128xbf16, #tpu.memory_space<vmem>>, vector<1x1x128xbf16>
    %26 = vector.shape_cast %25 : vector<1x1x128xbf16> to vector<1x128xbf16>
    %27 = vector.shape_cast %24 : vector<1x128xbf16> to vector<1x1x128xbf16>
    tpu.vector_store %arg4[%c0_10, %c0_11, %c0_12], %27 {strides = array<i32>} : memref<1x1x128xbf16, #tpu.memory_space<vmem>>, vector<1x1x128xbf16>,
    return
  }
  func.func @transform_0(%arg0: i32) -> (i32, i32, i32) {
    %c0_i32 = arith.constant 0 : i32
    %c0_i32_0 = arith.constant 0 : i32
    %c0_i32_1 = arith.constant 0 : i32
    return %arg0, %c0_i32, %c0_i32_0 : i32, i32, i32
  }
  func.func @transform_1(%arg0: i32) -> (i32, i32) {
    %c0_i32 = arith.constant 0 : i32
    %c0_i32_0 = arith.constant 0 : i32
    %c0_i32_1 = arith.constant 0 : i32
    return %c0_i32, %c0_i32_0 : i32, i32
  }
  func.func @transform_2(%arg0: i32) -> (i32, i32) {
    %c0_i32 = arith.constant 0 : i32
    %c0_i32_0 = arith.constant 0 : i32
    %c0_i32_1 = arith.constant 0 : i32
    return %c0_i32, %c0_i32_0 : i32, i32
  }
  func.func @transform_3(%arg0: i32) -> (i32, i32, i32) {
    %c0_i32 = arith.constant 0 : i32
    %c0_i32_0 = arith.constant 0 : i32
    %c0_i32_1 = arith.constant 0 : i32
    return %arg0, %c0_i32, %c0_i32_0 : i32, i32, i32
  }
}

</mosaic_0001>

<llo_original>
// kernel: tpu_custom_call.1
$region0: #{tpu_custom_call.1}
  #allocation0 [shape = 'u32[]', space=smem, size = 0x4, offset = 0x4, fixed_abs, tag = 'smem constant byte address 0x4 - core index']
  #allocation1 [shape = 'u32[72,128]{1,0:T(1,128)}', space=vmem, size = 0x9000, scoped, tag = 'internal scratch']
  %s0 = inlined_call_operand.hbm [shape: f32[2,1,128], index: 0, kind: input, shape index: {}]
  %s1 = inlined_call_operand.hbm [shape: f32[1,128], index: 1, kind: input, shape index: {}]
  %s2 = inlined_call_operand.vmem [shape: f32[1,128], index: 2, kind: input, shape index: {}]
  %s3 = inlined_call_operand.vmem [shape: bf16[2,1,128], index: 3, kind: output, shape index: {}]
  %s4 = sld [smem:[#allocation0]]
  $region53: #{tpu_custom_call.1} parent=0
    _
  %s6 = ssub.s32 1, %s4
  %s7 = scalar_select 0, %s6, %s4
  $region1: #{tpu_custom_call.1} parent=0
    #allocation2 [shape = 'u8[1024]{0}', space=vmem, size = 0x400, scoped, tag = 'input window, operand 0']
    #allocation3 [shape = 's32[2]{0}', space=sflag, size = 0x8, scoped, tag = 'scoped memory for tpu_custom_call.1']
    #allocation4 [shape = 'u8[512]{0}', space=vmem, size = 0x400, scoped, tag = 'input window, operand 1, single buffered']
    #allocation5 [shape = 's32[1]{0}', space=sflag, size = 0x4, scoped, tag = 'scoped memory for tpu_custom_call.1']
    %8 = vsyncpa [#allocation3], 0
    %s9 = scalar_lea.sflag [#allocation3], 1
    %10 = vsyncpa %s9, 0
    %11 = vsyncpa [#allocation5], 0
    loop: start=0, step=1, limit=4
    $region2: #{tpu_custom_call.1} parent=1 // loop_pre_header
      _
    $region3: #{tpu_custom_call.1} parent=1 // loop_header
      %s13 = sphi 0, %s17
      %p14 = scmp.ge.s32.totalorder %s13, 4
      %s23 = sphi 0, %s25
      %s26 = sphi 0, %s23
      %s27 = sphi 0, %s26
      %s43 = sphi 0, %s27
      %s47 = sphi 0, %s47
      %s49 = sphi 0, %s47
      %s50 = sphi 0, %s49
      %s64 = sphi 0, %s50
      %s68 = sphi 0, %s68
      %s70 = sphi 0, %s68
      %s71 = sphi 0, %s70
      %s85 = sphi 0, %s71
      %s91 = sphi 0, %s93
      %s94 = sphi 0, %s91
      %s95 = sphi 0, %s94
      %s111 = sphi 0, %s95
    $region4: #{tpu_custom_call.1} parent=1 // loop_header_branch
      %16 = sbr.rel (%p14) target = $region8
    $region5: #{tpu_custom_call.1} parent=1 // loop_body
      %s18 = ssub.s32 %s13, 1
      %s19 = ssub.s32 %s13, 2
      %s20 = sadd.s32 %s13, 1
      %s21 = ssub.s32 %s13, %s20
      %p22 = scmp.eq.s32.totalorder %s21, 0
      %s24 = sadd.s32 %s23, 1
      %s25 = scalar_select %p22, %s23, %s24
      %p28 = pneg %p22
      %p29 = scmp.eq.s32.totalorder %s13, 1
      %p30 = por %p28, %p29
      %p31 = scmp.ne.s32.totalorder %s23, %s26
      %p32 = scmp.eq.s32.totalorder %s13, 0
      %p33 = por %p31, %p32
      %p34 = scmp.ne.s32.totalorder %s23, %s26
      %p35 = scmp.eq.s32.totalorder %s18, 1
      %p36 = por %p34, %p35
      %p37 = scmp.ne.s32.totalorder %s26, %s27
      %p38 = scmp.eq.s32.totalorder %s18, 0
      %p39 = por %p37, %p38
      %p40 = scmp.ne.s32.totalorder %s26, %s27
      %p41 = scmp.eq.s32.totalorder %s19, 1
      %p42 = por %p40, %p41
      %p44 = scmp.ne.s32.totalorder %s27, %s43
      %p45 = scmp.eq.s32.totalorder %s19, 0
      %p46 = por %p44, %p45
      %s48 = sadd.s32 %s47, 1
      %p51 = scmp.eq.s32.totalorder %s13, 1
      %p52 = scmp.ne.s32.totalorder %s47, %s49
      %p53 = scmp.eq.s32.totalorder %s13, 0
      %p54 = por %p52, %p53
      %p55 = scmp.ne.s32.totalorder %s47, %s49
      %p56 = scmp.eq.s32.totalorder %s18, 1
      %p57 = por %p55, %p56
      %p58 = scmp.ne.s32.totalorder %s49, %s50
      %p59 = scmp.eq.s32.totalorder %s18, 0
      %p60 = por %p58, %p59
      %p61 = scmp.ne.s32.totalorder %s49, %s50
      %p62 = scmp.eq.s32.totalorder %s19, 1
      %p63 = por %p61, %p62
      %p65 = scmp.ne.s32.totalorder %s50, %s64
      %p66 = scmp.eq.s32.totalorder %s19, 0
      %p67 = por %p65, %p66
      %s69 = sadd.s32 %s68, 1
      %p72 = scmp.eq.s32.totalorder %s13, 1
      %p73 = scmp.ne.s32.totalorder %s68, %s70
      %p74 = scmp.eq.s32.totalorder %s13, 0
      %p75 = por %p73, %p74
      %p76 = scmp.ne.s32.totalorder %s68, %s70
      %p77 = scmp.eq.s32.totalorder %s18, 1
      %p78 = por %p76, %p77
      %p79 = scmp.ne.s32.totalorder %s70, %s71
      %p80 = scmp.eq.s32.totalorder %s18, 0
      %p81 = por %p79, %p80
      %p82 = scmp.ne.s32.totalorder %s70, %s71
      %p83 = scmp.eq.s32.totalorder %s19, 1
      %p84 = por %p82, %p83
      %p86 = scmp.ne.s32.totalorder %s71, %s85
      %p87 = scmp.eq.s32.totalorder %s19, 0
      %p88 = por %p86, %p87
      %s89 = ssub.s32 %s13, %s20
      %p90 = scmp.eq.s32.totalorder %s89, 0
      %s92 = sadd.s32 %s91, 1
      %s93 = scalar_select %p90, %s91, %s92
      %p96 = pneg %p90
      %p97 = scmp.eq.s32.totalorder %s13, 1
      %p98 = por %p96, %p97
      %p99 = scmp.ne.s32.totalorder %s91, %s94
      %p100 = scmp.eq.s32.totalorder %s13, 0
      %p101 = por %p99, %p100
      %p102 = scmp.ne.s32.totalorder %s91, %s94
      %p103 = scmp.eq.s32.totalorder %s18, 1
      %p104 = por %p102, %p103
      %p105 = scmp.ne.s32.totalorder %s94, %s95
      %p106 = scmp.eq.s32.totalorder %s18, 0
      %p107 = por %p105, %p106
      %p108 = scmp.ne.s32.totalorder %s94, %s95
      %p109 = scmp.eq.s32.totalorder %s19, 1
      %p110 = por %p108, %p109
      %p112 = scmp.ne.s32.totalorder %s95, %s111
      %p113 = scmp.eq.s32.totalorder %s19, 0
      %p114 = por %p112, %p113
      %p115 = scmp.le.s32.totalorder 1, %s13
      %p116 = scmp.lt.s32.totalorder %s13, 3
      %p117 = pnand %p115, %p116
      %p118 = pneg %p117
      // Predicated region
      $region9: #{tpu_custom_call.1} parent=5 // pred_check
        _
      $region10: #{tpu_custom_call.1} parent=5 // pred_check_branch
        %120 = sbr.rel (%p117) target = $region12
      $region11: #{tpu_custom_call.1} parent=5 // pred_region
        %s121 = ssub.s32 %s13, 1
        // Predicated region
        $region13: #{tpu_custom_call.1} parent=11 // pred_check
          %p122 = pneg %p60
        $region14: #{tpu_custom_call.1} parent=11 // pred_check_branch
          %124 = sbr.rel (%p122) target = $region16
        $region15: #{tpu_custom_call.1} parent=11 // pred_region
          %126 = vsyncadd [#allocation5], 0
          %s128 = sshll.u32 %s1, 4
          %s129 = int_to_ptr.hbm [resolvable:$true] %s128
          %s130 = sshll.u32 [#allocation4], 4
          %s131 = int_to_ptr.vmem [resolvable:$true] %s130
          %133 = dma.hbm_to_vmem [thread:$0]  %s129, 16, %s131, [#allocation5]
        $region16: #{tpu_custom_call.1} parent=11 // pred_fallthru
          _
        // Predicated region
        $region17: #{tpu_custom_call.1} parent=11 // pred_check
          %p134 = pneg %p81
        $region18: #{tpu_custom_call.1} parent=11 // pred_check_branch
          %136 = sbr.rel (%p134) target = $region20
        $region19: #{tpu_custom_call.1} parent=11 // pred_region
          _
        $region20: #{tpu_custom_call.1} parent=11 // pred_fallthru
          _
      $region12: #{tpu_custom_call.1} parent=5 // pred_fallthru
        _
      %p137 = scmp.lt.s32.totalorder %s13, 2
      // Predicated region
      $region21: #{tpu_custom_call.1} parent=5 // pred_check
        %p138 = pneg %p137
      $region22: #{tpu_custom_call.1} parent=5 // pred_check_branch
        %140 = sbr.rel (%p138) target = $region24
      $region23: #{tpu_custom_call.1} parent=5 // pred_region
        // Predicated region
        $region25: #{tpu_custom_call.1} parent=23 // pred_check
          %p141 = pneg %p33
        $region26: #{tpu_custom_call.1} parent=23 // pred_check_branch
          %143 = sbr.rel (%p141) target = $region28
        $region27: #{tpu_custom_call.1} parent=23 // pred_region
          %s144 = sand.u32 %s23, 1
          %s145 = scalar_lea.sflag [#allocation3], %s144
          %s146 = sand.u32 %s23, 1
          %s147 = scalar_lea.vmem [#allocation2], %s146
          %149 = vsyncadd %s145, 0
          %s150 = scalar_lea.hbm %s0, %s13
          %s152 = sshll.u32 %s150, 4
          %s153 = int_to_ptr.hbm [resolvable:$true] %s152
          %s154 = sshll.u32 %s147, 4
          %s155 = int_to_ptr.vmem [resolvable:$true] %s154
          %157 = dma.hbm_to_vmem [thread:$0]  %s153, 16, %s155, %s145
        $region28: #{tpu_custom_call.1} parent=23 // pred_fallthru
          _
      $region24: #{tpu_custom_call.1} parent=5 // pred_fallthru
        _
      %p158 = scmp.le.s32.totalorder 1, %s13
      %p159 = scmp.lt.s32.totalorder %s13, 3
      %p160 = pnand %p158, %p159
      %p161 = pneg %p160
      // Predicated region
      $region29: #{tpu_custom_call.1} parent=5 // pred_check
        _
      $region30: #{tpu_custom_call.1} parent=5 // pred_check_branch
        %163 = sbr.rel (%p160) target = $region32
      $region31: #{tpu_custom_call.1} parent=5 // pred_region
        %s164 = ssub.s32 %s13, 1
        %s165 = sand.u32 %s26, 1
        %s166 = scalar_lea.sflag [#allocation3], %s165
        %s167 = sand.u32 %s26, 1
        %s168 = scalar_lea.vmem [#allocation2], %s167
        // Predicated region
        $region33: #{tpu_custom_call.1} parent=31 // pred_check
          %p169 = pneg %p39
        $region34: #{tpu_custom_call.1} parent=31 // pred_check_branch
          %171 = sbr.rel (%p169) target = $region36
        $region35: #{tpu_custom_call.1} parent=31 // pred_region
          %173 = dma.done %s166, 16
        $region36: #{tpu_custom_call.1} parent=31 // pred_fallthru
          _
        // Predicated region
        $region37: #{tpu_custom_call.1} parent=31 // pred_check
          %p174 = pneg %p60
        $region38: #{tpu_custom_call.1} parent=31 // pred_check_branch
          %176 = sbr.rel (%p174) target = $region40
        $region39: #{tpu_custom_call.1} parent=31 // pred_region
          %178 = dma.done [#allocation5], 16
        $region40: #{tpu_custom_call.1} parent=31 // pred_fallthru
          _
        %s179 = sand.u32 %s26, 1
        %s180 = scalar_lea.sflag [#allocation3], %s179
        %s181 = sand.u32 %s26, 1
        %s182 = scalar_lea.vmem [#allocation2], %s181
        %p183 = pneg %p39
        %p184 = pneg %p36
        %p185 = pneg %p60
        %p186 = pneg %p57
        %p187 = pneg %p81
        %p188 = pneg %p78
        %p189 = pneg %p107
        %p190 = pneg %p104
        %p191 = scmp.lt.s32.totalorder %s18, 1
        %s192 = scalar_select %p191, %s18, 1
        %s193 = scalar_lea.vmem %s3, %s192
        %p194 = scmp.lt.s32.totalorder %s18, 1
        %s195 = scalar_select %p194, %s18, 1
        %s196 = scalar_lea.vmem %s3, %s195
        %v197 = vld [vmem:[%s168] sm:$0x1]
        %vm198 = vcmask 1040384
        %v199 = vsel %vm198, %v197, 0.0
        %200 = vadd.xlane.f32.xlu0 %v199
        %v201 = vpop.xlane.xlu0 %200
        %v202 = vmul.f32 %v201, 0.03125
        %v203 = vmul.f32 %v197, %v197
        %v204 = vsel %vm198, %v203, 0.0
        %205 = vadd.xlane.f32.xlu0 %v204
        %v206 = vpop.xlane.xlu0 %205
        %v207 = vmul.f32 %v206, 0.03125
        %v208 = vmul.f32 %v202, %v202
        %v209 = vsub.f32 %v207, %v208
        %v210 = vsub.f32 %v197, %v202
        %v211 = vadd.f32 %v209, 1e-05
        %v212 = vrsqrt.pop %v211
        %v213 = vmul.f32 %v212, %v211
        %v214 = vmul.f32 %v213, %v212
        %v215 = vmul.f32 0.5, %v214
        %v216 = vsub.f32 1.5, %v215
        %v217 = vmul.f32 %v212, %v216
        %vm218 = vweird.f32 %v211
        %vm219 = vweird.f32 %v212
        %vm220 = vmor %vm218, %vm219
        %v221 = vsel %vm220, %v212, %v217
        %v222 = vmul.f32 %v210, %v221
        %v223 = vld [vmem:[#allocation4] sm:$0x1]
        %v224 = vmul.f32 %v222, %v223
        %v225 = vld [vmem:[%s2] sm:$0x1]
        %v226 = vadd.f32 %v224, %v225
        %v227 = vpack.c.bf16 %v226, %v226
        %vm228 = vcmask 1040384
        %vm229 = vsmask.f32 256
        %vm230 = vmand %vm228, %vm229
        %v231 = vld [vmem:[%s196] sm:$0x1]
        %v232 = vsel %vm230, %v227, %v231
        %233 = vst [vmem:[%s196] sm:$0x1] %v232
        %p234 = scmp.lt.s32.totalorder %s18, 1
        %s235 = scalar_select %p234, %s18, 1
        %s236 = scalar_lea.vmem %s3, %s235
        // Predicated region
        $region41: #{tpu_custom_call.1} parent=31 // pred_check
          %p237 = pneg %p104
        $region42: #{tpu_custom_call.1} parent=31 // pred_check_branch
          %239 = sbr.rel (%p237) target = $region44
        $region43: #{tpu_custom_call.1} parent=31 // pred_region
          _
        $region44: #{tpu_custom_call.1} parent=31 // pred_fallthru
          _
      $region32: #{tpu_custom_call.1} parent=5 // pred_fallthru
        _
      %p240 = scmp.le.s32.totalorder 2, %s13
      // Predicated region
      $region45: #{tpu_custom_call.1} parent=5 // pred_check
        %p241 = pneg %p240
      $region46: #{tpu_custom_call.1} parent=5 // pred_check_branch
        %243 = sbr.rel (%p241) target = $region48
      $region47: #{tpu_custom_call.1} parent=5 // pred_region
        %s244 = ssub.s32 %s13, 2
        // Predicated region
        $region49: #{tpu_custom_call.1} parent=47 // pred_check
          %p245 = pneg %p110
        $region50: #{tpu_custom_call.1} parent=47 // pred_check_branch
          %247 = sbr.rel (%p245) target = $region52
        $region51: #{tpu_custom_call.1} parent=47 // pred_region
          %p248 = scmp.lt.s32.totalorder %s19, 1
          %s249 = scalar_select %p248, %s19, 1
          %s250 = scalar_lea.vmem %s3, %s249
        $region52: #{tpu_custom_call.1} parent=47 // pred_fallthru
          _
      $region48: #{tpu_custom_call.1} parent=5 // pred_fallthru
        _
    $region6: #{tpu_custom_call.1} parent=1 // loop_footer
      %s17 = sadd.s32 1, %s13
    $region7: #{tpu_custom_call.1} parent=1 // loop_footer_branch
      %12 = sbr.rel target = $region3
    $region8: #{tpu_custom_call.1} parent=1 // loop_exit
      _
    %251 = vsyncpa [#allocation3], 1
    %s252 = scalar_lea.sflag [#allocation3], 1
    %253 = vsyncpa %s252, 1
    %254 = vsyncpa [#allocation5], 1

</llo_original>
